<compile_context>
chip_gen: v7x
topology: tpu7x:2x2x1
jax: 0.10.0
libtpu: 0.0.40
codegen_flags: <defaults>
</compile_context>

<pallas_src>
import functools

import jax
import jax.numpy as jnp
from jax import lax
from jax.experimental import pallas as pl
from jax.experimental.pallas import tpu as pltpu


def _choose_heads_per_block(num_heads, head_size):
    """Smallest group size G (dividing H) whose output slab G*Hd is a 128-lane
    multiple (unmasked stores, full MXU N-width); falls back to all heads so the
    output block spans the full D (always a legal full-extent block)."""
    for g in range(1, num_heads + 1):
        if num_heads % g == 0 and (g * head_size) % 128 == 0:
            return g
    return num_heads


def _mha_group_kernel(x_ref, w_ref, b_ref, o_ref, *, head_size, heads_per_block):
    """One grid step = one (batch, head-group).  bf16 MXU operands, f32 accumulation,
    f32 softmax.  The 1/sqrt(Hd) scale is pre-folded into the q weights."""
    g_hd = heads_per_block * head_size

    x = x_ref[0]                                   # (S, D) bf16 (cast hoisted to wrapper)
    w = w_ref[0]                                   # (3*G*Hd, D) bf16, nn.Linear (out, in)
    b = b_ref[0]                                   # (1, 3*G*Hd) f32

    # Fused QKV projection for the whole head group: contract D of x with D of w.
    qkv = lax.dot_general(
        x, w, (((1,), (1,)), ((), ())),
        preferred_element_type=jnp.float32) + b    # (S, 3*G*Hd) f32

    # Column layout: [q heads | k heads | v heads]; blocks start at G*Hd boundaries.
    q_blk = qkv[:, :g_hd].astype(jnp.bfloat16)
    k_blk = qkv[:, g_hd:2 * g_hd].astype(jnp.bfloat16)
    v_blk = qkv[:, 2 * g_hd:].astype(jnp.bfloat16)

    ctxs = []
    for g in range(heads_per_block):               # static unroll over heads in the group
        sl = slice(g * head_size, (g + 1) * head_size)
        q = q_blk[:, sl]
        k = k_blk[:, sl]
        v = v_blk[:, sl]

        # scores = q @ k^T (softmax scale already folded into q weights).
        scores = lax.dot_general(
            q, k, (((1,), (1,)), ((), ())),
            preferred_element_type=jnp.float32)    # (S, S) f32

        # Numerically stable softmax in f32; divide -> EUP reciprocal multiply.
        m = jnp.max(scores, axis=-1, keepdims=True)
        p = jnp.exp(scores - m)
        denom = jnp.sum(p, axis=-1, keepdims=True)
        probs = p * pl.reciprocal(denom, approx=True)

        ctxs.append(jnp.dot(probs.astype(jnp.bfloat16), v,
                            preferred_element_type=jnp.float32))   # (S, Hd) f32

    # Single lane-dense, full-block store for this (batch, head-group) tile.
    o_ref[0] = jnp.concatenate(ctxs, axis=-1).astype(o_ref.dtype)


@functools.partial(jax.jit, static_argnames=("num_heads", "heads_per_block"))
def multi_head_attention(hidden_states, wq, bq, wk, bk, wv, bv, *,
                         num_heads, heads_per_block=None):
    """hidden_states: (B, S, D).  wq/wk/wv: (D, D) in nn.Linear (out, in) layout; b*: (D,)."""
    B, S, D = hidden_states.shape
    H = num_heads
    Hd = D // H
    G = heads_per_block if heads_per_block is not None else _choose_heads_per_block(H, Hd)
    assert H % G == 0, (H, G)
    NG = H // G
    GHd = G * Hd

    inv_scale = 1.0 / (Hd ** 0.5)

    # Fold the softmax scale into q's weights/bias (one-time wrapper-side cost).
    wq_s = wq * inv_scale
    bq_s = bq * inv_scale

    # Pack per-group fused QKV weights (NG, 3*G*Hd, D), keeping the (out, in)
    # orientation (no wrapper transposes); columns ordered [q_group | k_group | v_group].
    w_qkv = jnp.concatenate(
        [wq_s.reshape(NG, GHd, D),
         wk.reshape(NG, GHd, D),
         wv.reshape(NG, GHd, D)], axis=1).astype(jnp.bfloat16)       # (NG, 3*GHd, D)
    b_qkv = jnp.concatenate(
        [bq_s.reshape(NG, 1, GHd),
         bk.reshape(NG, 1, GHd),
         bv.reshape(NG, 1, GHd)], axis=-1).astype(jnp.float32)       # (NG, 1, 3*GHd)

    # bf16 cast hoisted out of the kernel: halves x DMA bytes, removes per-step cast.
    x_bf16 = hidden_states.astype(jnp.bfloat16)

    kernel = functools.partial(_mha_group_kernel, head_size=Hd, heads_per_block=G)

    out_itemsize = jnp.dtype(hidden_states.dtype).itemsize
    cost = pl.CostEstimate(
        flops=int(2 * B * S * D * 3 * D + 4 * B * H * S * S * Hd),
        transcendentals=int(B * H * S * S),
        bytes_accessed=int(B * S * D * 2            # x (bf16)
                           + B * 3 * D * D * 2      # packed weights (re-fetched per batch)
                           + B * 3 * D * 4          # biases
                           + B * S * D * out_itemsize),
    )

    out = pl.pallas_call(
        kernel,
        out_shape=jax.ShapeDtypeStruct((B, S, D), hidden_states.dtype),
        grid_spec=pltpu.PrefetchScalarGridSpec(
            num_scalar_prefetch=0,
            grid=(B, NG),
            in_specs=[
                # x block constant across the head-group axis -> DMA'd once per batch.
                pl.BlockSpec((1, S, D), lambda b, g: (b, 0, 0)),
                # Per-group weight/bias blocks: only one group double-buffered in VMEM.
                pl.BlockSpec((1, 3 * GHd, D), lambda b, g: (g, 0, 0)),
                pl.BlockSpec((1, 1, 3 * GHd), lambda b, g: (g, 0, 0)),
            ],
            # Head-grouped, lane-dense direct store into (B, S, D): no wrapper
            # transpose / extra HBM pass.
            out_specs=pl.BlockSpec((1, S, GHd), lambda b, g: (b, 0, g)),
        ),
        compiler_params=pltpu.CompilerParams(
            dimension_semantics=("parallel", "parallel"),
            vmem_limit_bytes=64 * 1024 * 1024),
        cost_estimate=cost,
    )(x_bf16, w_qkv, b_qkv)

    return out


def _reference(hidden_states, wq, bq, wk, bk, wv, bv, *, num_heads):
    """Pure-JAX f32 reference mirroring the PyTorch forward (mask=None, eval mode)."""
    B, S, D = hidden_states.shape
    Hd = D // num_heads

    def lin(x, w, b):
        return jnp.einsum('bsd,od->bso', x, w) + b

    def split_heads(x):
        return x.reshape(B, S, num_heads, Hd).transpose(0, 2, 1, 3)  # (B, H, S, Hd)

    q = split_heads(lin(hidden_states, wq, bq))
    k = split_heads(lin(hidden_states, wk, bk))
    v = split_heads(lin(hidden_states, wv, bv))

    scores = jnp.einsum('bhsd,bhtd->bhst', q, k) / (Hd ** 0.5)
    probs = jax.nn.softmax(scores, axis=-1)
    ctx = jnp.einsum('bhst,bhtd->bhsd', probs, v)
    return ctx.transpose(0, 2, 1, 3).reshape(B, S, D)


if __name__ == "__main__":
    # Small config consistent with the module: dim=32, heads=4, seq=8, batch=2.
    B, S, D, H = 2, 8, 32, 4

    key = jax.random.PRNGKey(0)
    k_x, k_wq, k_bq, k_wk, k_bk, k_wv, k_bv = jax.random.split(key, 7)

    x = jax.random.normal(k_x, (B, S, D), dtype=jnp.float32)
    # nn.Linear weight layout: (out_features, in_features)
    wq = jax.random.normal(k_wq, (D, D), dtype=jnp.float32) * 0.05
    bq = jax.random.normal(k_bq, (D,), dtype=jnp.float32) * 0.05
    wk = jax.random.normal(k_wk, (D, D), dtype=jnp.float32) * 0.05
    bk = jax.random.normal(k_bk, (D,), dtype=jnp.float32) * 0.05
    wv = jax.random.normal(k_wv, (D, D), dtype=jnp.float32) * 0.05
    bv = jax.random.normal(k_bv, (D,), dtype=jnp.float32) * 0.05

    out = multi_head_attention(x, wq, bq, wk, bk, wv, bv, num_heads=H)
    out = jax.block_until_ready(out)

    ref = _reference(x, wq, bq, wk, bk, wv, bv, num_heads=H)
    assert out.shape == (B, S, D), out.shape
    max_diff = jnp.max(jnp.abs(out - ref))
    # bf16 MXU inputs + approx reciprocal => compare against the f32 reference
    # with a correspondingly relaxed tolerance.
    assert jnp.allclose(out, ref, atol=3e-2, rtol=3e-2), f"max abs diff {max_diff}"

    print("KERNEL_OK")
</pallas_src>

<mosaic_0001>
module attributes {stable_mosaic.version = 11 : i64} {
  func.func @_mha_group_kernel(%arg0: i32, %arg1: i32, %arg2: memref<1x8x32xbf16, #tpu.memory_space<vmem>>, %arg3: memref<1x96x32xbf16, #tpu.memory_space<vmem>>, %arg4: memref<1x1x96xf32, #tpu.memory_space<vmem>>, %arg5: memref<1x8x32xf32, #tpu.memory_space<vmem>>) attributes {dimension_semantics = [#tpu.dimension_semantics<parallel>, #tpu.dimension_semantics<parallel>], iteration_bounds = array<i64: 2, 1>, scalar_prefetch = 0 : i64, scratch_operands = 0 : i64, tpu.core_type = #tpu.core_type<tc>, window_params = [{transform_indices = @transform_0, window_bounds = array<i64: 1, 8, 32>}, {transform_indices = @transform_1, window_bounds = array<i64: 1, 96, 32>}, {transform_indices = @transform_2, window_bounds = array<i64: 1, 1, 96>}, {transform_indices = @transform_3, window_bounds = array<i64: 1, 8, 32>}]} {
    %c0 = arith.constant 0 : index
    %c0_0 = arith.constant 0 : index
    %c0_1 = arith.constant 0 : index
    %0 = vector.load %arg2[%c0, %c0_0, %c0_1] : memref<1x8x32xbf16, #tpu.memory_space<vmem>>, vector<1x8x32xbf16>
    %1 = vector.shape_cast %0 : vector<1x8x32xbf16> to vector<8x32xbf16>
    %c0_2 = arith.constant 0 : index
    %c0_3 = arith.constant 0 : index
    %c0_4 = arith.constant 0 : index
    %2 = vector.load %arg3[%c0_2, %c0_3, %c0_4] : memref<1x96x32xbf16, #tpu.memory_space<vmem>>, vector<1x96x32xbf16>
    %3 = vector.shape_cast %2 : vector<1x96x32xbf16> to vector<96x32xbf16>
    %c0_5 = arith.constant 0 : index
    %c0_6 = arith.constant 0 : index
    %c0_7 = arith.constant 0 : index
    %4 = vector.load %arg4[%c0_5, %c0_6, %c0_7] : memref<1x1x96xf32, #tpu.memory_space<vmem>>, vector<1x1x96xf32>
    %5 = vector.shape_cast %4 : vector<1x1x96xf32> to vector<1x96xf32>
    %cst = arith.constant dense<0.000000e+00> : vector<8x96xf32>
    %6 = tpu.matmul %1, %3, %cst {dimension_numbers = #tpu.dot_dimension_numbers<[1], [1], [0], [0], [0, 0, 1, 0], [], []>} : vector<8x32xbf16>, vector<96x32xbf16>, vector<8x96xf32> -> vector<8x96xf32>
    %7 = vector.broadcast %5 : vector<1x96xf32> to vector<8x96xf32>
    %8 = arith.addf %6, %7 : vector<8x96xf32>
    %9 = vector.extract_strided_slice %8 {offsets = [0, 0], sizes = [8, 32], strides = [1, 1]} : vector<8x96xf32> to vector<8x32xf32>
    %10 = arith.truncf %9 : vector<8x32xf32> to vector<8x32xbf16>
    %11 = vector.extract_strided_slice %8 {offsets = [0, 32], sizes = [8, 32], strides = [1, 1]} : vector<8x96xf32> to vector<8x32xf32>
    %12 = arith.truncf %11 : vector<8x32xf32> to vector<8x32xbf16>
    %13 = vector.extract_strided_slice %8 {offsets = [0, 64], sizes = [8, 32], strides = [1, 1]} : vector<8x96xf32> to vector<8x32xf32>
    %14 = arith.truncf %13 : vector<8x32xf32> to vector<8x32xbf16>
    %15 = vector.extract_strided_slice %10 {offsets = [0, 0], sizes = [8, 8], strides = [1, 1]} : vector<8x32xbf16> to vector<8x8xbf16>
    %16 = vector.extract_strided_slice %12 {offsets = [0, 0], sizes = [8, 8], strides = [1, 1]} : vector<8x32xbf16> to vector<8x8xbf16>
    %17 = vector.extract_strided_slice %14 {offsets = [0, 0], sizes = [8, 8], strides = [1, 1]} : vector<8x32xbf16> to vector<8x8xbf16>
    %cst_8 = arith.constant dense<0.000000e+00> : vector<8x8xf32>
    %18 = tpu.matmul %15, %16, %cst_8 {dimension_numbers = #tpu.dot_dimension_numbers<[1], [1], [0], [0], [0, 0, 1, 0], [], []>} : vector<8x8xbf16>, vector<8x8xbf16>, vector<8x8xf32> -> vector<8x8xf32>
    %cst_9 = arith.constant dense<0xFF800000> : vector<8xf32>
    %19 = vector.multi_reduction <maximumf>, %18, %cst_9 [1] : vector<8x8xf32> to vector<8xf32>
    %20 = vector.shape_cast %19 : vector<8xf32> to vector<8x1xf32>
    %21 = vector.broadcast %20 : vector<8x1xf32> to vector<8x8xf32>
    %22 = arith.subf %18, %21 : vector<8x8xf32>
    %23 = math.exp %22 : vector<8x8xf32>
    %cst_10 = arith.constant dense<0.000000e+00> : vector<8xf32>
    %24 = vector.multi_reduction <add>, %23, %cst_10 [1] : vector<8x8xf32> to vector<8xf32>
    %25 = vector.shape_cast %24 : vector<8xf32> to vector<8x1xf32>
    %26 = tpu.reciprocal %25 {approx = true} : vector<8x1xf32> -> vector<8x1xf32>
    %27 = vector.broadcast %26 : vector<8x1xf32> to vector<8x8xf32>
    %28 = arith.mulf %23, %27 : vector<8x8xf32>
    %29 = arith.truncf %28 : vector<8x8xf32> to vector<8x8xbf16>
    %cst_11 = arith.constant dense<0.000000e+00> : vector<8x8xf32>
    %30 = tpu.matmul %29, %17, %cst_11 {dimension_numbers = #tpu.dot_dimension_numbers<[1], [0], [0], [1], [0, 0, 1, 1], [], []>} : vector<8x8xbf16>, vector<8x8xbf16>, vector<8x8xf32> -> vector<8x8xf32>
    %31 = vector.extract_strided_slice %10 {offsets = [0, 8], sizes = [8, 8], strides = [1, 1]} : vector<8x32xbf16> to vector<8x8xbf16>
    %32 = vector.extract_strided_slice %12 {offsets = [0, 8], sizes = [8, 8], strides = [1, 1]} : vector<8x32xbf16> to vector<8x8xbf16>
    %33 = vector.extract_strided_slice %14 {offsets = [0, 8], sizes = [8, 8], strides = [1, 1]} : vector<8x32xbf16> to vector<8x8xbf16>
    %cst_12 = arith.constant dense<0.000000e+00> : vector<8x8xf32>
    %34 = tpu.matmul %31, %32, %cst_12 {dimension_numbers = #tpu.dot_dimension_numbers<[1], [1], [0], [0], [0, 0, 1, 0], [], []>} : vector<8x8xbf16>, vector<8x8xbf16>, vector<8x8xf32> -> vector<8x8xf32>
    %cst_13 = arith.constant dense<0xFF800000> : vector<8xf32>
    %35 = vector.multi_reduction <maximumf>, %34, %cst_13 [1] : vector<8x8xf32> to vector<8xf32>
    %36 = vector.shape_cast %35 : vector<8xf32> to vector<8x1xf32>
    %37 = vector.broadcast %36 : vector<8x1xf32> to vector<8x8xf32>
    %38 = arith.subf %34, %37 : vector<8x8xf32>
    %39 = math.exp %38 : vector<8x8xf32>
    %cst_14 = arith.constant dense<0.000000e+00> : vector<8xf32>
    %40 = vector.multi_reduction <add>, %39, %cst_14 [1] : vector<8x8xf32> to vector<8xf32>
    %41 = vector.shape_cast %40 : vector<8xf32> to vector<8x1xf32>
    %42 = tpu.reciprocal %41 {approx = true} : vector<8x1xf32> -> vector<8x1xf32>
    %43 = vector.broadcast %42 : vector<8x1xf32> to vector<8x8xf32>
    %44 = arith.mulf %39, %43 : vector<8x8xf32>
    %45 = arith.truncf %44 : vector<8x8xf32> to vector<8x8xbf16>
    %cst_15 = arith.constant dense<0.000000e+00> : vector<8x8xf32>
    %46 = tpu.matmul %45, %33, %cst_15 {dimension_numbers = #tpu.dot_dimension_numbers<[1], [0], [0], [1], [0, 0, 1, 1], [], []>} : vector<8x8xbf16>, vector<8x8xbf16>, vector<8x8xf32> -> vector<8x8xf32>
    %47 = vector.extract_strided_slice %10 {offsets = [0, 16], sizes = [8, 8], strides = [1, 1]} : vector<8x32xbf16> to vector<8x8xbf16>
    %48 = vector.extract_strided_slice %12 {offsets = [0, 16], sizes = [8, 8], strides = [1, 1]} : vector<8x32xbf16> to vector<8x8xbf16>
    %49 = vector.extract_strided_slice %14 {offsets = [0, 16], sizes = [8, 8], strides = [1, 1]} : vector<8x32xbf16> to vector<8x8xbf16>
    %cst_16 = arith.constant dense<0.000000e+00> : vector<8x8xf32>
    %50 = tpu.matmul %47, %48, %cst_16 {dimension_numbers = #tpu.dot_dimension_numbers<[1], [1], [0], [0], [0, 0, 1, 0], [], []>} : vector<8x8xbf16>, vector<8x8xbf16>, vector<8x8xf32> -> vector<8x8xf32>
    %cst_17 = arith.constant dense<0xFF800000> : vector<8xf32>
    %51 = vector.multi_reduction <maximumf>, %50, %cst_17 [1] : vector<8x8xf32> to vector<8xf32>
    %52 = vector.shape_cast %51 : vector<8xf32> to vector<8x1xf32>
    %53 = vector.broadcast %52 : vector<8x1xf32> to vector<8x8xf32>
    %54 = arith.subf %50, %53 : vector<8x8xf32>
    %55 = math.exp %54 : vector<8x8xf32>
    %cst_18 = arith.constant dense<0.000000e+00> : vector<8xf32>
    %56 = vector.multi_reduction <add>, %55, %cst_18 [1] : vector<8x8xf32> to vector<8xf32>
    %57 = vector.shape_cast %56 : vector<8xf32> to vector<8x1xf32>
    %58 = tpu.reciprocal %57 {approx = true} : vector<8x1xf32> -> vector<8x1xf32>
    %59 = vector.broadcast %58 : vector<8x1xf32> to vector<8x8xf32>
    %60 = arith.mulf %55, %59 : vector<8x8xf32>
    %61 = arith.truncf %60 : vector<8x8xf32> to vector<8x8xbf16>
    %cst_19 = arith.constant dense<0.000000e+00> : vector<8x8xf32>
    %62 = tpu.matmul %61, %49, %cst_19 {dimension_numbers = #tpu.dot_dimension_numbers<[1], [0], [0], [1], [0, 0, 1, 1], [], []>} : vector<8x8xbf16>, vector<8x8xbf16>, vector<8x8xf32> -> vector<8x8xf32>
    %63 = vector.extract_strided_slice %10 {offsets = [0, 24], sizes = [8, 8], strides = [1, 1]} : vector<8x32xbf16> to vector<8x8xbf16>
    %64 = vector.extract_strided_slice %12 {offsets = [0, 24], sizes = [8, 8], strides = [1, 1]} : vector<8x32xbf16> to vector<8x8xbf16>
    %65 = vector.extract_strided_slice %14 {offsets = [0, 24], sizes = [8, 8], strides = [1, 1]} : vector<8x32xbf16> to vector<8x8xbf16>
    %cst_20 = arith.constant dense<0.000000e+00> : vector<8x8xf32>
    %66 = tpu.matmul %63, %64, %cst_20 {dimension_numbers = #tpu.dot_dimension_numbers<[1], [1], [0], [0], [0, 0, 1, 0], [], []>} : vector<8x8xbf16>, vector<8x8xbf16>, vector<8x8xf32> -> vector<8x8xf32>
    %cst_21 = arith.constant dense<0xFF800000> : vector<8xf32>
    %67 = vector.multi_reduction <maximumf>, %66, %cst_21 [1] : vector<8x8xf32> to vector<8xf32>
    %68 = vector.shape_cast %67 : vector<8xf32> to vector<8x1xf32>
    %69 = vector.broadcast %68 : vector<8x1xf32> to vector<8x8xf32>
    %70 = arith.subf %66, %69 : vector<8x8xf32>
    %71 = math.exp %70 : vector<8x8xf32>
    %cst_22 = arith.constant dense<0.000000e+00> : vector<8xf32>
    %72 = vector.multi_reduction <add>, %71, %cst_22 [1] : vector<8x8xf32> to vector<8xf32>
    %73 = vector.shape_cast %72 : vector<8xf32> to vector<8x1xf32>
    %74 = tpu.reciprocal %73 {approx = true} : vector<8x1xf32> -> vector<8x1xf32>
    %75 = vector.broadcast %74 : vector<8x1xf32> to vector<8x8xf32>
    %76 = arith.mulf %71, %75 : vector<8x8xf32>
    %77 = arith.truncf %76 : vector<8x8xf32> to vector<8x8xbf16>
    %cst_23 = arith.constant dense<0.000000e+00> : vector<8x8xf32>
    %78 = tpu.matmul %77, %65, %cst_23 {dimension_numbers = #tpu.dot_dimension_numbers<[1], [0], [0], [1], [0, 0, 1, 1], [], []>} : vector<8x8xbf16>, vector<8x8xbf16>, vector<8x8xf32> -> vector<8x8xf32>
    %79 = tpu.concatenate %30, %46, %62, %78 in 1 : vector<8x8xf32>, vector<8x8xf32>, vector<8x8xf32>, vector<8x8xf32> -> vector<8x32xf32>
    %c0_24 = arith.constant 0 : index
    %c0_25 = arith.constant 0 : index
    %c0_26 = arith.constant 0 : index
    %80 = vector.load %arg5[%c0_24, %c0_25, %c0_26] : memref<1x8x32xf32, #tpu.memory_space<vmem>>, vector<1x8x32xf32>
    %81 = vector.shape_cast %80 : vector<1x8x32xf32> to vector<8x32xf32>
    %82 = vector.shape_cast %79 : vector<8x32xf32> to vector<1x8x32xf32>
    tpu.vector_store %arg5[%c0_24, %c0_25, %c0_26], %82 {strides = array<i32>} : memref<1x8x32xf32, #tpu.memory_space<vmem>>, vector<1x8x32xf32>,
    return
  }
  func.func @transform_0(%arg0: i32, %arg1: i32) -> (i32, i32, i32) {
    %c0_i32 = arith.constant 0 : i32
    %c0_i32_0 = arith.constant 0 : i32
    %c0_i32_1 = arith.constant 0 : i32
    return %arg0, %c0_i32, %c0_i32_0 : i32, i32, i32
  }
  func.func @transform_1(%arg0: i32, %arg1: i32) -> (i32, i32, i32) {
    %c0_i32 = arith.constant 0 : i32
    %c0_i32_0 = arith.constant 0 : i32
    %c0_i32_1 = arith.constant 0 : i32
    return %arg1, %c0_i32, %c0_i32_0 : i32, i32, i32
  }
  func.func @transform_2(%arg0: i32, %arg1: i32) -> (i32, i32, i32) {
    %c0_i32 = arith.constant 0 : i32
    %c0_i32_0 = arith.constant 0 : i32
    %c0_i32_1 = arith.constant 0 : i32
    return %arg1, %c0_i32, %c0_i32_0 : i32, i32, i32
  }
  func.func @transform_3(%arg0: i32, %arg1: i32) -> (i32, i32, i32) {
    %c0_i32 = arith.constant 0 : i32
    %c0_i32_0 = arith.constant 0 : i32
    return %arg0, %c0_i32, %arg1 : i32, i32, i32
  }
}

</mosaic_0001>

<llo_original>
// kernel: multi_head_attention.1
$region0: #{multi_head_attention.1}
  #allocation0 [shape = 'u32[]', space=smem, size = 0x4, offset = 0x4, fixed_abs, tag = 'smem constant byte address 0x4 - core index']
  #allocation1 [shape = 'u32[144,128]{1,0:T(1,128)}', space=vmem, size = 0x12000, scoped, tag = 'internal scratch']
  %s0 = inlined_call_operand.hbm [shape: bf16[2,8,32], index: 0, kind: input, shape index: {}]
  %s1 = inlined_call_operand.hbm [shape: bf16[1,96,32], index: 1, kind: input, shape index: {}]
  %s2 = inlined_call_operand.hbm [shape: f32[1,1,96], index: 2, kind: input, shape index: {}]
  %s3 = inlined_call_operand.hbm [shape: f32[2,8,32], index: 3, kind: output, shape index: {}]
  %s4 = sld [smem:[#allocation0]]
  $region57: #{multi_head_attention.1} parent=0
    _
  %s6 = ssub.s32 1, %s4
  %s7 = scalar_select 0, %s6, %s4
  $region1: #{multi_head_attention.1} parent=0
    #allocation2 [shape = 'u8[4096]{0}', space=vmem, size = 0x1000, scoped, tag = 'input window, operand 0']
    #allocation3 [shape = 's32[2]{0}', space=sflag, size = 0x8, scoped, tag = 'scoped memory for multi_head_attention.1']
    #allocation4 [shape = 's32[2]{0}', space=sflag, size = 0x8, scoped, tag = 'scoped memory for multi_head_attention.1']
    #allocation5 [shape = 'u8[24576]{0}', space=vmem, size = 0x6000, scoped, tag = 'input window, operand 1, single buffered']
    #allocation6 [shape = 's32[1]{0}', space=sflag, size = 0x4, scoped, tag = 'scoped memory for multi_head_attention.1']
    #allocation7 [shape = 'u8[512]{0}', space=vmem, size = 0x400, scoped, tag = 'input window, operand 2, single buffered']
    #allocation8 [shape = 'u8[8192]{0}', space=vmem, size = 0x2000, scoped, tag = 'output window, operand 0']
    %8 = vsyncpa [#allocation3], 0
    %s9 = scalar_lea.sflag [#allocation3], 1
    %10 = vsyncpa %s9, 0
    %11 = vsyncpa [#allocation6], 0
    %12 = vsyncpa [#allocation4], 0
    %s13 = scalar_lea.sflag [#allocation4], 1
    %14 = vsyncpa %s13, 0
    loop: start=0, step=1, limit=4
    $region2: #{multi_head_attention.1} parent=1 // loop_pre_header
      _
    $region3: #{multi_head_attention.1} parent=1 // loop_header
      %s16 = sphi 0, %s20
      %p17 = scmp.ge.s32.totalorder %s16, 4
      %s23 = sphi 0, %s35
      %s24 = sphi 0, %s31
      %s25 = sphi 0, %s23
      %s26 = sphi 0, %s24
      %s27 = sphi 0, %s25
      %s28 = sphi 0, %s26
      %s38 = sphi 0, %s40
      %s41 = sphi 0, %s38
      %s42 = sphi 0, %s41
      %s58 = sphi 0, %s42
      %s64 = sphi 0, %s66
      %s67 = sphi 0, %s64
      %s68 = sphi 0, %s67
      %s84 = sphi 0, %s68
      %s90 = sphi 0, %s92
      %s93 = sphi 0, %s90
      %s94 = sphi 0, %s93
      %s110 = sphi 0, %s94
      %s118 = sphi 0, %s120
      %s121 = sphi 0, %s118
      %s122 = sphi 0, %s121
      %s138 = sphi 0, %s122
    $region4: #{multi_head_attention.1} parent=1 // loop_header_branch
      %19 = sbr.rel (%p17) target = $region8
    $region5: #{multi_head_attention.1} parent=1 // loop_body
      %s21 = ssub.s32 %s16, 1
      %s22 = ssub.s32 %s16, 2
      %s29 = sadd.s32 1, %s24
      %p30 = scmp.ge.s32.totalorder %s29, 1
      %s31 = scalar_select %p30, 0, %s29
      %s32 = sadd.s32 1, %s23
      %s33 = scalar_select %p30, %s32, %s23
      %p34 = scmp.ge.s32.totalorder %s33, 2
      %s35 = scalar_select %p34, 0, %s33
      %s36 = ssub.s32 %s23, %s35
      %p37 = scmp.eq.s32.totalorder %s36, 0
      %s39 = sadd.s32 %s38, 1
      %s40 = scalar_select %p37, %s38, %s39
      %p43 = pneg %p37
      %p44 = scmp.eq.s32.totalorder %s16, 1
      %p45 = por %p43, %p44
      %p46 = scmp.ne.s32.totalorder %s38, %s41
      %p47 = scmp.eq.s32.totalorder %s16, 0
      %p48 = por %p46, %p47
      %p49 = scmp.ne.s32.totalorder %s38, %s41
      %p50 = scmp.eq.s32.totalorder %s21, 1
      %p51 = por %p49, %p50
      %p52 = scmp.ne.s32.totalorder %s41, %s42
      %p53 = scmp.eq.s32.totalorder %s21, 0
      %p54 = por %p52, %p53
      %p55 = scmp.ne.s32.totalorder %s41, %s42
      %p56 = scmp.eq.s32.totalorder %s22, 1
      %p57 = por %p55, %p56
      %p59 = scmp.ne.s32.totalorder %s42, %s58
      %p60 = scmp.eq.s32.totalorder %s22, 0
      %p61 = por %p59, %p60
      %s62 = ssub.s32 %s24, %s31
      %p63 = scmp.eq.s32.totalorder %s62, 0
      %s65 = sadd.s32 %s64, 1
      %s66 = scalar_select %p63, %s64, %s65
      %p69 = pneg %p63
      %p70 = scmp.eq.s32.totalorder %s16, 1
      %p71 = por %p69, %p70
      %p72 = scmp.ne.s32.totalorder %s64, %s67
      %p73 = scmp.eq.s32.totalorder %s16, 0
      %p74 = por %p72, %p73
      %p75 = scmp.ne.s32.totalorder %s64, %s67
      %p76 = scmp.eq.s32.totalorder %s21, 1
      %p77 = por %p75, %p76
      %p78 = scmp.ne.s32.totalorder %s67, %s68
      %p79 = scmp.eq.s32.totalorder %s21, 0
      %p80 = por %p78, %p79
      %p81 = scmp.ne.s32.totalorder %s67, %s68
      %p82 = scmp.eq.s32.totalorder %s22, 1
      %p83 = por %p81, %p82
      %p85 = scmp.ne.s32.totalorder %s68, %s84
      %p86 = scmp.eq.s32.totalorder %s22, 0
      %p87 = por %p85, %p86
      %s88 = ssub.s32 %s24, %s31
      %p89 = scmp.eq.s32.totalorder %s88, 0
      %s91 = sadd.s32 %s90, 1
      %s92 = scalar_select %p89, %s90, %s91
      %p95 = pneg %p89
      %p96 = scmp.eq.s32.totalorder %s16, 1
      %p97 = por %p95, %p96
      %p98 = scmp.ne.s32.totalorder %s90, %s93
      %p99 = scmp.eq.s32.totalorder %s16, 0
      %p100 = por %p98, %p99
      %p101 = scmp.ne.s32.totalorder %s90, %s93
      %p102 = scmp.eq.s32.totalorder %s21, 1
      %p103 = por %p101, %p102
      %p104 = scmp.ne.s32.totalorder %s93, %s94
      %p105 = scmp.eq.s32.totalorder %s21, 0
      %p106 = por %p104, %p105
      %p107 = scmp.ne.s32.totalorder %s93, %s94
      %p108 = scmp.eq.s32.totalorder %s22, 1
      %p109 = por %p107, %p108
      %p111 = scmp.ne.s32.totalorder %s94, %s110
      %p112 = scmp.eq.s32.totalorder %s22, 0
      %p113 = por %p111, %p112
      %s114 = ssub.s32 %s23, %s35
      %s115 = ssub.s32 %s24, %s31
      %s116 = sor.u32 %s114, %s115
      %p117 = scmp.eq.s32.totalorder %s116, 0
      %s119 = sadd.s32 %s118, 1
      %s120 = scalar_select %p117, %s118, %s119
      %p123 = pneg %p117
      %p124 = scmp.eq.s32.totalorder %s16, 1
      %p125 = por %p123, %p124
      %p126 = scmp.ne.s32.totalorder %s118, %s121
      %p127 = scmp.eq.s32.totalorder %s16, 0
      %p128 = por %p126, %p127
      %p129 = scmp.ne.s32.totalorder %s118, %s121
      %p130 = scmp.eq.s32.totalorder %s21, 1
      %p131 = por %p129, %p130
      %p132 = scmp.ne.s32.totalorder %s121, %s122
      %p133 = scmp.eq.s32.totalorder %s21, 0
      %p134 = por %p132, %p133
      %p135 = scmp.ne.s32.totalorder %s121, %s122
      %p136 = scmp.eq.s32.totalorder %s22, 1
      %p137 = por %p135, %p136
      %p139 = scmp.ne.s32.totalorder %s122, %s138
      %p140 = scmp.eq.s32.totalorder %s22, 0
      %p141 = por %p139, %p140
      %p142 = scmp.le.s32.totalorder 1, %s16
      %p143 = scmp.lt.s32.totalorder %s16, 3
      %p144 = pnand %p142, %p143
      %p145 = pneg %p144
      // Predicated region
      $region9: #{multi_head_attention.1} parent=5 // pred_check
        _
      $region10: #{multi_head_attention.1} parent=5 // pred_check_branch
        %147 = sbr.rel (%p144) target = $region12
      $region11: #{multi_head_attention.1} parent=5 // pred_region
        %s148 = ssub.s32 %s16, 1
        // Predicated region
        $region13: #{multi_head_attention.1} parent=11 // pred_check
          %p149 = pneg %p80
        $region14: #{multi_head_attention.1} parent=11 // pred_check_branch
          %151 = sbr.rel (%p149) target = $region16
        $region15: #{multi_head_attention.1} parent=11 // pred_region
          %s153 = ssub.s32 768, 768
          %154 = vsyncadd [#allocation6], %s153
          %s155 = smul.addr %s26, 12
          %s156 = smul.addr %s155, 64
          %s157 = scalar_lea.hbm %s1, %s156
          %s158 = sshll.u32 [#allocation5], 4
          %s159 = int_to_ptr.vmem [resolvable:$true] %s158
          %164 = dma.hbm_to_vmem [thread:$0]  %s157, 768, %s159, [#allocation6], 64, 64, 4
        $region16: #{multi_head_attention.1} parent=11 // pred_fallthru
          _
        // Predicated region
        $region17: #{multi_head_attention.1} parent=11 // pred_check
          %p165 = pneg %p106
        $region18: #{multi_head_attention.1} parent=11 // pred_check_branch
          %167 = sbr.rel (%p165) target = $region20
        $region19: #{multi_head_attention.1} parent=11 // pred_region
          %s169 = ssub.s32 16, 16
          %170 = vsyncadd [#allocation6], %s169
          %s171 = smul.addr %s26, 16
          %s172 = scalar_lea.hbm %s2, %s171
          %s174 = sshll.u32 [#allocation7], 4
          %s175 = int_to_ptr.vmem [resolvable:$true] %s174
          %177 = dma.hbm_to_vmem [thread:$0]  %s172, 16, %s175, [#allocation6]
        $region20: #{multi_head_attention.1} parent=11 // pred_fallthru
          _
      $region12: #{multi_head_attention.1} parent=5 // pred_fallthru
        _
      %p178 = scmp.lt.s32.totalorder %s16, 2
      // Predicated region
      $region21: #{multi_head_attention.1} parent=5 // pred_check
        %p179 = pneg %p178
      $region22: #{multi_head_attention.1} parent=5 // pred_check_branch
        %181 = sbr.rel (%p179) target = $region24
      $region23: #{multi_head_attention.1} parent=5 // pred_region
        // Predicated region
        $region25: #{multi_head_attention.1} parent=23 // pred_check
          %p182 = pneg %p48
        $region26: #{multi_head_attention.1} parent=23 // pred_check_branch
          %184 = sbr.rel (%p182) target = $region28
        $region27: #{multi_head_attention.1} parent=23 // pred_region
          %s185 = sand.u32 %s38, 1
          %s186 = scalar_lea.sflag [#allocation3], %s185
          %s187 = sand.u32 %s38, 1
          %s188 = smul.addr %s187, 4
          %s189 = scalar_lea.vmem [#allocation2], %s188
          %s191 = ssub.s32 64, 64
          %192 = vsyncadd %s186, %s191
          %s193 = smul.addr %s23, 64
          %s194 = scalar_lea.hbm %s0, %s193
          %s196 = sshll.u32 %s189, 4
          %s197 = int_to_ptr.vmem [resolvable:$true] %s196
          %199 = dma.hbm_to_vmem [thread:$0]  %s194, 64, %s197, %s186
        $region28: #{multi_head_attention.1} parent=23 // pred_fallthru
          _
      $region24: #{multi_head_attention.1} parent=5 // pred_fallthru
        _
      %p200 = scmp.le.s32.totalorder 1, %s16
      %p201 = scmp.lt.s32.totalorder %s16, 3
      %p202 = pnand %p200, %p201
      %p203 = pneg %p202
      // Predicated region
      $region29: #{multi_head_attention.1} parent=5 // pred_check
        _
      $region30: #{multi_head_attention.1} parent=5 // pred_check_branch
        %205 = sbr.rel (%p202) target = $region32
      $region31: #{multi_head_attention.1} parent=5 // pred_region
        %s206 = ssub.s32 %s16, 1
        %s207 = sand.u32 %s41, 1
        %s208 = scalar_lea.sflag [#allocation3], %s207
        %s209 = sand.u32 %s41, 1
        %s210 = smul.addr %s209, 4
        %s211 = scalar_lea.vmem [#allocation2], %s210
        // Predicated region
        $region33: #{multi_head_attention.1} parent=31 // pred_check
          %p212 = pneg %p54
        $region34: #{multi_head_attention.1} parent=31 // pred_check_branch
          %214 = sbr.rel (%p212) target = $region36
        $region35: #{multi_head_attention.1} parent=31 // pred_region
          %215 = dma.done %s208, 64
        $region36: #{multi_head_attention.1} parent=31 // pred_fallthru
          _
        // Predicated region
        $region37: #{multi_head_attention.1} parent=31 // pred_check
          %p216 = pneg %p80
        $region38: #{multi_head_attention.1} parent=31 // pred_check_branch
          %218 = sbr.rel (%p216) target = $region40
        $region39: #{multi_head_attention.1} parent=31 // pred_region
          %219 = dma.done [#allocation6], 768
        $region40: #{multi_head_attention.1} parent=31 // pred_fallthru
          _
        // Predicated region
        $region41: #{multi_head_attention.1} parent=31 // pred_check
          %p220 = pneg %p106
        $region42: #{multi_head_attention.1} parent=31 // pred_check_branch
          %222 = sbr.rel (%p220) target = $region44
        $region43: #{multi_head_attention.1} parent=31 // pred_region
          %223 = dma.done [#allocation6], 16
        $region44: #{multi_head_attention.1} parent=31 // pred_fallthru
          _
        %s224 = sand.u32 %s41, 1
        %s225 = scalar_lea.sflag [#allocation3], %s224
        %s226 = sand.u32 %s41, 1
        %s227 = smul.addr %s226, 4
        %s228 = scalar_lea.vmem [#allocation2], %s227
        %p229 = pneg %p54
        %p230 = pneg %p51
        %p231 = pneg %p80
        %p232 = pneg %p77
        %p233 = pneg %p106
        %p234 = pneg %p103
        %p235 = pneg %p134
        %p236 = pneg %p131
        %s237 = sand.u32 %s121, 1
        %s238 = scalar_lea.sflag [#allocation4], %s237
        %s239 = sand.u32 %s121, 1
        %s240 = smul.addr %s239, 8
        %s241 = scalar_lea.vmem [#allocation8], %s240
        %v243 = vld [vmem:[%s211] sm:$0xf]
        %v244 = vld [vmem:[#allocation5] sm:$0xf]
        %v245 = vld [vmem:[#allocation5 + $0x4] sm:$0xf]
        %v246 = vld [vmem:[#allocation5 + $0x8] sm:$0xf]
        %v247 = vld [vmem:[#allocation5 + $0xc] sm:$0xf]
        %v248 = vld [vmem:[#allocation5 + $0x10] sm:$0xf]
        %v249 = vld [vmem:[#allocation5 + $0x14] sm:$0xf]
        %v250 = vld [vmem:[#allocation5 + $0x18] sm:$0xf]
        %v251 = vld [vmem:[#allocation5 + $0x1c] sm:$0xf]
        %v252 = vld [vmem:[#allocation5 + $0x20] sm:$0xf]
        %v253 = vld [vmem:[#allocation5 + $0x24] sm:$0xf]
        %v254 = vld [vmem:[#allocation5 + $0x28] sm:$0xf]
        %v255 = vld [vmem:[#allocation5 + $0x2c] sm:$0xf]
        %v256 = vld [vmem:[#allocation7] sm:$0x1]
        %v258 = vlaneseq
        %v259 = vshrl.u32 %v258, 7
        %v260 = vsub.s32 0, %v259
        %v261 = vrot.slane %v256, %v260
        %v275 = vunpack.c.l.b16 %v244
        %v276 = vunpack.c.l.b16 %v245
        %v277 = vunpack.c.l.b16 %v246
        %v278 = vunpack.c.l.b16 %v247
        %v279 = vunpack.c.l.b16 %v248
        %v280 = vunpack.c.l.b16 %v249
        %v281 = vunpack.c.l.b16 %v250
        %v282 = vunpack.c.l.b16 %v251
        %v283 = vunpack.c.l.b16 %v252
        %v284 = vunpack.c.l.b16 %v253
        %v285 = vunpack.c.l.b16 %v254
        %v286 = vunpack.c.l.b16 %v255
        %v287 = vpack.c.b16 %v276, %v275
        %v288 = vpack.c.b16 %v278, %v277
        %v289 = vpack.c.b16 %v280, %v279
        %v290 = vpack.c.b16 %v282, %v281
        %v291 = vpack.c.b16 %v284, %v283
        %v292 = vpack.c.b16 %v286, %v285
        %vm293 = vcmask 261120
        %v295 = vsel %vm293, %v243, 0
        %v298 = vsel %vm293, %v287, 0
        %v301 = vsel %vm293, %v288, 0
        %v304 = vsel %vm293, %v289, 0
        %v307 = vsel %vm293, %v290, 0
        %v310 = vsel %vm293, %v291, 0
        %v313 = vsel %vm293, %v292, 0
        %315 = vmatprep.subr.bf16.mxu0 0
        %316 = vmatpush1.bf16.xpose.msra.mxu0 %v298
        %317 = vmatprep.subr.bf16.mxu0 0
        %318 = vmatpush1.bf16.xpose.msra.mxu0 %v301
        %319 = vmatprep.subr.bf16.mxu0 0
        %320 = vmatpush1.bf16.xpose.msra.mxu0 %v304
        %321 = vmatprep.subr.bf16.mxu0 0
        %322 = vmatpush1.bf16.xpose.msra.mxu0 %v307
        %323 = vmatprep.subr.bf16.mxu0 0
        %324 = vmatpush1.bf16.xpose.msra.mxu0 %v310
        %325 = vmatprep.subr.bf16.mxu0 0
        %326 = vmatpush1.bf16.xpose.msra.mxu0 %v313
        %327 = vmatprep.subr.bf16.mxu0 0
        %328 = vmatpush1.bf16.xpose.msra.mxu0 0
        %329 = vmatprep.subr.bf16.mxu0 0
        %330 = vmatpush1.bf16.xpose.msra.mxu0 0
        %331 = vmatprep.subr.bf16.mxu0 0
        %332 = vmatpush1.bf16.xpose.msra.mxu0 0
        %333 = vmatprep.subr.bf16.mxu0 0
        %334 = vmatpush1.bf16.xpose.msra.mxu0 0
        %335 = vmatprep.subr.bf16.mxu0 0
        %336 = vmatpush1.bf16.xpose.msra.mxu0 0
        %337 = vmatprep.subr.bf16.mxu0 0
        %338 = vmatpush1.bf16.xpose.msra.mxu0 0
        %339 = vmatprep.subr.bf16.mxu0 0
        %340 = vmatpush1.bf16.xpose.msra.mxu0 0
        %341 = vmatprep.subr.bf16.mxu0 0
        %342 = vmatpush1.bf16.xpose.msra.mxu0 0
        %343 = vmatprep.subr.bf16.mxu0 0
        %344 = vmatpush1.bf16.xpose.msra.mxu0 0
        %345 = vmatprep.subr.bf16.mxu0 0
        %346 = vmatpush1.bf16.xpose.msra.mxu0 0
        %347 = vmatprep.mubr.bf16.mxu0 0
        %348 = vmatmul.mubr.bf16.gmra.mrb[0].mxu0 %v295
        %v349 = vpop.f32.mrb[0].mxu0
        %v350 = vadd.f32 %v261, %v349
        %v351 = vpop.f32.mrb[0].mxu0
        %v352 = vpop.f32.mrb[0].mxu0
        %v353 = vpop.f32.mrb[0].mxu0
        %354 = vdwg.mxu0
        %v355 = vpack.c.bf16 %v350, %v350
        %357 = vrot.lane.b32.xlu0 %v355, 96
        %v358 = vpop.permute.xlu0 %357
        %vm359 = vcmask 64512
        %v361 = vsel %vm359, %v355, 0
        %v364 = vsel %vm359, %v358, 0
        %366 = vmatprep.subr.bf16.mxu0 0
        %367 = vmatpush1.bf16.xpose.msra.mxu0 %v364
        %368 = vmatprep.subr.bf16.mxu0 0
        %369 = vmatpush1.bf16.xpose.msra.mxu0 0
        %370 = vmatprep.subr.bf16.mxu0 0
        %371 = vmatpush1.bf16.xpose.msra.mxu0 0
        %372 = vmatprep.subr.bf16.mxu0 0
        %373 = vmatpush1.bf16.xpose.msra.mxu0 0
        %374 = vmatprep.subr.bf16.mxu0 0
        %375 = vmatpush1.bf16.xpose.msra.mxu0 0
        %376 = vmatprep.subr.bf16.mxu0 0
        %377 = vmatpush1.bf16.xpose.msra.mxu0 0
        %378 = vmatprep.subr.bf16.mxu0 0
        %379 = vmatpush1.bf16.xpose.msra.mxu0 0
        %380 = vmatprep.subr.bf16.mxu0 0
        %381 = vmatpush1.bf16.xpose.msra.mxu0 0
        %382 = vmatprep.subr.bf16.mxu0 0
        %383 = vmatpush1.bf16.xpose.msra.mxu0 0
        %384 = vmatprep.subr.bf16.mxu0 0
        %385 = vmatpush1.bf16.xpose.msra.mxu0 0
        %386 = vmatprep.subr.bf16.mxu0 0
        %387 = vmatpush1.bf16.xpose.msra.mxu0 0
        %388 = vmatprep.subr.bf16.mxu0 0
        %389 = vmatpush1.bf16.xpose.msra.mxu0 0
        %390 = vmatprep.subr.bf16.mxu0 0
        %391 = vmatpush1.bf16.xpose.msra.mxu0 0
        %392 = vmatprep.subr.bf16.mxu0 0
        %393 = vmatpush1.bf16.xpose.msra.mxu0 0
        %394 = vmatprep.subr.bf16.mxu0 0
        %395 = vmatpush1.bf16.xpose.msra.mxu0 0
        %396 = vmatprep.subr.bf16.mxu0 0
        %397 = vmatpush1.bf16.xpose.msra.mxu0 0
        %398 = vmatprep.mubr.bf16.mxu0 0
        %399 = vmatmul.mubr.bf16.gmra.mrb[0].mxu0 %v361
        %v400 = vpop.f32.mrb[0].mxu0
        %v401 = vadd.f32 0.0, %v400
        %v402 = vpop.f32.mrb[0].mxu0
        %v403 = vpop.f32.mrb[0].mxu0
        %v404 = vpop.f32.mrb[0].mxu0
        %405 = vdwg.mxu0
        %v406 = vsel %vm359, %v401, -inf
        %407 = vmax.xlane.f32.xlu0 %v406
        %v408 = vpop.xlane.xlu0 %407
        %v409 = vsub.f32 %v401, %v408
        %v410 = vmul.f32 %v409, 1.442695
        %v411 = vpow.pop %v410
        %v412 = vsel %vm359, %v411, 0.0
        %413 = vadd.xlane.f32.xlu0 %v412
        %v414 = vpop.xlane.xlu0 %413
        %v415 = vrcp.pop %v414
        %v416 = vmul.f32 %v411, %v415
        %v417 = vpack.c.bf16 %v416, %v416
        %418 = vrot.lane.b32.xlu0 %v355, 64
        %v419 = vpop.permute.xlu0 %418
        %v421 = vsel %vm359, %v417, 0
        %vm423 = vcmask 1043456
        %v425 = vsel %vm423, %v419, 0
        %427 = vmatprep.subr.bf16.mxu0 0
        %428 = vmatpush1.bf16.msra.mxu0 %v425
        %429 = vmatprep.subr.bf16.mxu0 0
        %430 = vmatpush1.bf16.msra.mxu0 0
        %431 = vmatprep.subr.bf16.mxu0 0
        %432 = vmatpush1.bf16.msra.mxu0 0
        %433 = vmatprep.subr.bf16.mxu0 0
        %434 = vmatpush1.bf16.msra.mxu0 0
        %435 = vmatprep.subr.bf16.mxu0 0
        %436 = vmatpush1.bf16.msra.mxu0 0
        %437 = vmatprep.subr.bf16.mxu0 0
        %438 = vmatpush1.bf16.msra.mxu0 0
        %439 = vmatprep.subr.bf16.mxu0 0
        %440 = vmatpush1.bf16.msra.mxu0 0
        %441 = vmatprep.subr.bf16.mxu0 0
        %442 = vmatpush1.bf16.msra.mxu0 0
        %443 = vmatprep.subr.bf16.mxu0 0
        %444 = vmatpush1.bf16.msra.mxu0 0
        %445 = vmatprep.subr.bf16.mxu0 0
        %446 = vmatpush1.bf16.msra.mxu0 0
        %447 = vmatprep.subr.bf16.mxu0 0
        %448 = vmatpush1.bf16.msra.mxu0 0
        %449 = vmatprep.subr.bf16.mxu0 0
        %450 = vmatpush1.bf16.msra.mxu0 0
        %451 = vmatprep.subr.bf16.mxu0 0
        %452 = vmatpush1.bf16.msra.mxu0 0
        %453 = vmatprep.subr.bf16.mxu0 0
        %454 = vmatpush1.bf16.msra.mxu0 0
        %455 = vmatprep.subr.bf16.mxu0 0
        %456 = vmatpush1.bf16.msra.mxu0 0
        %457 = vmatprep.subr.bf16.mxu0 0
        %458 = vmatpush1.bf16.msra.mxu0 0
        %459 = vmatprep.mubr.bf16.mxu0 0
        %460 = vmatmul.mubr.bf16.gmra.mrb[0].mxu0 %v421
        %v461 = vpop.f32.mrb[0].mxu0
        %v462 = vadd.f32 0.0, %v461
        %v463 = vpop.f32.mrb[0].mxu0
        %v464 = vpop.f32.mrb[0].mxu0
        %v465 = vpop.f32.mrb[0].mxu0
        %466 = vdwg.mxu0
        %467 = vrot.lane.b32.xlu0 %v355, 120
        %v468 = vpop.permute.xlu0 %467
        %469 = vrot.lane.b32.xlu0 %v355, 88
        %v470 = vpop.permute.xlu0 %469
        %v472 = vsel %vm359, %v468, 0
        %v475 = vsel %vm359, %v470, 0
        %477 = vmatprep.subr.bf16.mxu0 0
        %478 = vmatpush1.bf16.xpose.msra.mxu0 %v475
        %479 = vmatprep.subr.bf16.mxu0 0
        %480 = vmatpush1.bf16.xpose.msra.mxu0 0
        %481 = vmatprep.subr.bf16.mxu0 0
        %482 = vmatpush1.bf16.xpose.msra.mxu0 0
        %483 = vmatprep.subr.bf16.mxu0 0
        %484 = vmatpush1.bf16.xpose.msra.mxu0 0
        %485 = vmatprep.subr.bf16.mxu0 0
        %486 = vmatpush1.bf16.xpose.msra.mxu0 0
        %487 = vmatprep.subr.bf16.mxu0 0
        %488 = vmatpush1.bf16.xpose.msra.mxu0 0
        %489 = vmatprep.subr.bf16.mxu0 0
        %490 = vmatpush1.bf16.xpose.msra.mxu0 0
        %491 = vmatprep.subr.bf16.mxu0 0
        %492 = vmatpush1.bf16.xpose.msra.mxu0 0
        %493 = vmatprep.subr.bf16.mxu0 0
        %494 = vmatpush1.bf16.xpose.msra.mxu0 0
        %495 = vmatprep.subr.bf16.mxu0 0
        %496 = vmatpush1.bf16.xpose.msra.mxu0 0
        %497 = vmatprep.subr.bf16.mxu0 0
        %498 = vmatpush1.bf16.xpose.msra.mxu0 0
        %499 = vmatprep.subr.bf16.mxu0 0
        %500 = vmatpush1.bf16.xpose.msra.mxu0 0
        %501 = vmatprep.subr.bf16.mxu0 0
        %502 = vmatpush1.bf16.xpose.msra.mxu0 0
        %503 = vmatprep.subr.bf16.mxu0 0
        %504 = vmatpush1.bf16.xpose.msra.mxu0 0
        %505 = vmatprep.subr.bf16.mxu0 0
        %506 = vmatpush1.bf16.xpose.msra.mxu0 0
        %507 = vmatprep.subr.bf16.mxu0 0
        %508 = vmatpush1.bf16.xpose.msra.mxu0 0
        %509 = vmatprep.mubr.bf16.mxu0 0
        %510 = vmatmul.mubr.bf16.gmra.mrb[0].mxu0 %v472
        %v511 = vpop.f32.mrb[0].mxu0
        %v512 = vadd.f32 0.0, %v511
        %v513 = vpop.f32.mrb[0].mxu0
        %v514 = vpop.f32.mrb[0].mxu0
        %v515 = vpop.f32.mrb[0].mxu0
        %516 = vdwg.mxu0
        %v517 = vsel %vm359, %v512, -inf
        %518 = vmax.xlane.f32.xlu0 %v517
        %v519 = vpop.xlane.xlu0 %518
        %v520 = vsub.f32 %v512, %v519
        %v521 = vmul.f32 %v520, 1.442695
        %v522 = vpow.pop %v521
        %v523 = vsel %vm359, %v522, 0.0
        %524 = vadd.xlane.f32.xlu0 %v523
        %v525 = vpop.xlane.xlu0 %524
        %v526 = vrcp.pop %v525
        %v527 = vmul.f32 %v522, %v526
        %v528 = vpack.c.bf16 %v527, %v527
        %529 = vrot.lane.b32.xlu0 %v355, 56
        %v530 = vpop.permute.xlu0 %529
        %v532 = vsel %vm359, %v528, 0
        %v535 = vsel %vm423, %v530, 0
        %537 = vmatprep.subr.bf16.mxu0 0
        %538 = vmatpush1.bf16.msra.mxu0 %v535
        %539 = vmatprep.subr.bf16.mxu0 0
        %540 = vmatpush1.bf16.msra.mxu0 0
        %541 = vmatprep.subr.bf16.mxu0 0
        %542 = vmatpush1.bf16.msra.mxu0 0
        %543 = vmatprep.subr.bf16.mxu0 0
        %544 = vmatpush1.bf16.msra.mxu0 0
        %545 = vmatprep.subr.bf16.mxu0 0
        %546 = vmatpush1.bf16.msra.mxu0 0
        %547 = vmatprep.subr.bf16.mxu0 0
        %548 = vmatpush1.bf16.msra.mxu0 0
        %549 = vmatprep.subr.bf16.mxu0 0
        %550 = vmatpush1.bf16.msra.mxu0 0
        %551 = vmatprep.subr.bf16.mxu0 0
        %552 = vmatpush1.bf16.msra.mxu0 0
        %553 = vmatprep.subr.bf16.mxu0 0
        %554 = vmatpush1.bf16.msra.mxu0 0
        %555 = vmatprep.subr.bf16.mxu0 0
        %556 = vmatpush1.bf16.msra.mxu0 0
        %557 = vmatprep.subr.bf16.mxu0 0
        %558 = vmatpush1.bf16.msra.mxu0 0
        %559 = vmatprep.subr.bf16.mxu0 0
        %560 = vmatpush1.bf16.msra.mxu0 0
        %561 = vmatprep.subr.bf16.mxu0 0
        %562 = vmatpush1.bf16.msra.mxu0 0
        %563 = vmatprep.subr.bf16.mxu0 0
        %564 = vmatpush1.bf16.msra.mxu0 0
        %565 = vmatprep.subr.bf16.mxu0 0
        %566 = vmatpush1.bf16.msra.mxu0 0
        %567 = vmatprep.subr.bf16.mxu0 0
        %568 = vmatpush1.bf16.msra.mxu0 0
        %569 = vmatprep.mubr.bf16.mxu0 0
        %570 = vmatmul.mubr.bf16.gmra.mrb[0].mxu0 %v532
        %v571 = vpop.f32.mrb[0].mxu0
        %v572 = vadd.f32 0.0, %v571
        %v573 = vpop.f32.mrb[0].mxu0
        %v574 = vpop.f32.mrb[0].mxu0
        %v575 = vpop.f32.mrb[0].mxu0
        %576 = vdwg.mxu0
        %577 = vrot.lane.b32.xlu0 %v355, 112
        %v578 = vpop.permute.xlu0 %577
        %579 = vrot.lane.b32.xlu0 %v355, 80
        %v580 = vpop.permute.xlu0 %579
        %v582 = vsel %vm359, %v578, 0
        %v585 = vsel %vm359, %v580, 0
        %587 = vmatprep.subr.bf16.mxu0 0
        %588 = vmatpush1.bf16.xpose.msra.mxu0 %v585
        %589 = vmatprep.subr.bf16.mxu0 0
        %590 = vmatpush1.bf16.xpose.msra.mxu0 0
        %591 = vmatprep.subr.bf16.mxu0 0
        %592 = vmatpush1.bf16.xpose.msra.mxu0 0
        %593 = vmatprep.subr.bf16.mxu0 0
        %594 = vmatpush1.bf16.xpose.msra.mxu0 0
        %595 = vmatprep.subr.bf16.mxu0 0
        %596 = vmatpush1.bf16.xpose.msra.mxu0 0
        %597 = vmatprep.subr.bf16.mxu0 0
        %598 = vmatpush1.bf16.xpose.msra.mxu0 0
        %599 = vmatprep.subr.bf16.mxu0 0
        %600 = vmatpush1.bf16.xpose.msra.mxu0 0
        %601 = vmatprep.subr.bf16.mxu0 0
        %602 = vmatpush1.bf16.xpose.msra.mxu0 0
        %603 = vmatprep.subr.bf16.mxu0 0
        %604 = vmatpush1.bf16.xpose.msra.mxu0 0
        %605 = vmatprep.subr.bf16.mxu0 0
        %606 = vmatpush1.bf16.xpose.msra.mxu0 0
        %607 = vmatprep.subr.bf16.mxu0 0
        %608 = vmatpush1.bf16.xpose.msra.mxu0 0
        %609 = vmatprep.subr.bf16.mxu0 0
        %610 = vmatpush1.bf16.xpose.msra.mxu0 0
        %611 = vmatprep.subr.bf16.mxu0 0
        %612 = vmatpush1.bf16.xpose.msra.mxu0 0
        %613 = vmatprep.subr.bf16.mxu0 0
        %614 = vmatpush1.bf16.xpose.msra.mxu0 0
        %615 = vmatprep.subr.bf16.mxu0 0
        %616 = vmatpush1.bf16.xpose.msra.mxu0 0
        %617 = vmatprep.subr.bf16.mxu0 0
        %618 = vmatpush1.bf16.xpose.msra.mxu0 0
        %619 = vmatprep.mubr.bf16.mxu0 0
        %620 = vmatmul.mubr.bf16.gmra.mrb[0].mxu0 %v582
        %v621 = vpop.f32.mrb[0].mxu0
        %v622 = vadd.f32 0.0, %v621
        %v623 = vpop.f32.mrb[0].mxu0
        %v624 = vpop.f32.mrb[0].mxu0
        %v625 = vpop.f32.mrb[0].mxu0
        %626 = vdwg.mxu0
        %v627 = vsel %vm359, %v622, -inf
        %628 = vmax.xlane.f32.xlu0 %v627
        %v629 = vpop.xlane.xlu0 %628
        %v630 = vsub.f32 %v622, %v629
        %v631 = vmul.f32 %v630, 1.442695
        %v632 = vpow.pop %v631
        %v633 = vsel %vm359, %v632, 0.0
        %634 = vadd.xlane.f32.xlu0 %v633
        %v635 = vpop.xlane.xlu0 %634
        %v636 = vrcp.pop %v635
        %v637 = vmul.f32 %v632, %v636
        %v638 = vpack.c.bf16 %v637, %v637
        %639 = vrot.lane.b32.xlu0 %v355, 48
        %v640 = vpop.permute.xlu0 %639
        %v642 = vsel %vm359, %v638, 0
        %v645 = vsel %vm423, %v640, 0
        %647 = vmatprep.subr.bf16.mxu0 0
        %648 = vmatpush1.bf16.msra.mxu0 %v645
        %649 = vmatprep.subr.bf16.mxu0 0
        %650 = vmatpush1.bf16.msra.mxu0 0
        %651 = vmatprep.subr.bf16.mxu0 0
        %652 = vmatpush1.bf16.msra.mxu0 0
        %653 = vmatprep.subr.bf16.mxu0 0
        %654 = vmatpush1.bf16.msra.mxu0 0
        %655 = vmatprep.subr.bf16.mxu0 0
        %656 = vmatpush1.bf16.msra.mxu0 0
        %657 = vmatprep.subr.bf16.mxu0 0
        %658 = vmatpush1.bf16.msra.mxu0 0
        %659 = vmatprep.subr.bf16.mxu0 0
        %660 = vmatpush1.bf16.msra.mxu0 0
        %661 = vmatprep.subr.bf16.mxu0 0
        %662 = vmatpush1.bf16.msra.mxu0 0
        %663 = vmatprep.subr.bf16.mxu0 0
        %664 = vmatpush1.bf16.msra.mxu0 0
        %665 = vmatprep.subr.bf16.mxu0 0
        %666 = vmatpush1.bf16.msra.mxu0 0
        %667 = vmatprep.subr.bf16.mxu0 0
        %668 = vmatpush1.bf16.msra.mxu0 0
        %669 = vmatprep.subr.bf16.mxu0 0
        %670 = vmatpush1.bf16.msra.mxu0 0
        %671 = vmatprep.subr.bf16.mxu0 0
        %672 = vmatpush1.bf16.msra.mxu0 0
        %673 = vmatprep.subr.bf16.mxu0 0
        %674 = vmatpush1.bf16.msra.mxu0 0
        %675 = vmatprep.subr.bf16.mxu0 0
        %676 = vmatpush1.bf16.msra.mxu0 0
        %677 = vmatprep.subr.bf16.mxu0 0
        %678 = vmatpush1.bf16.msra.mxu0 0
        %679 = vmatprep.mubr.bf16.mxu0 0
        %680 = vmatmul.mubr.bf16.gmra.mrb[0].mxu0 %v642
        %v681 = vpop.f32.mrb[0].mxu0
        %v682 = vadd.f32 0.0, %v681
        %v683 = vpop.f32.mrb[0].mxu0
        %v684 = vpop.f32.mrb[0].mxu0
        %v685 = vpop.f32.mrb[0].mxu0
        %686 = vdwg.mxu0
        %687 = vrot.lane.b32.xlu0 %v355, 104
        %v688 = vpop.permute.xlu0 %687
        %689 = vrot.lane.b32.xlu0 %v355, 72
        %v690 = vpop.permute.xlu0 %689
        %v692 = vsel %vm359, %v688, 0
        %v695 = vsel %vm359, %v690, 0
        %697 = vmatprep.subr.bf16.mxu0 0
        %698 = vmatpush1.bf16.xpose.msra.mxu0 %v695
        %699 = vmatprep.subr.bf16.mxu0 0
        %700 = vmatpush1.bf16.xpose.msra.mxu0 0
        %701 = vmatprep.subr.bf16.mxu0 0
        %702 = vmatpush1.bf16.xpose.msra.mxu0 0
        %703 = vmatprep.subr.bf16.mxu0 0
        %704 = vmatpush1.bf16.xpose.msra.mxu0 0
        %705 = vmatprep.subr.bf16.mxu0 0
        %706 = vmatpush1.bf16.xpose.msra.mxu0 0
        %707 = vmatprep.subr.bf16.mxu0 0
        %708 = vmatpush1.bf16.xpose.msra.mxu0 0
        %709 = vmatprep.subr.bf16.mxu0 0
        %710 = vmatpush1.bf16.xpose.msra.mxu0 0
        %711 = vmatprep.subr.bf16.mxu0 0
        %712 = vmatpush1.bf16.xpose.msra.mxu0 0
        %713 = vmatprep.subr.bf16.mxu0 0
        %714 = vmatpush1.bf16.xpose.msra.mxu0 0
        %715 = vmatprep.subr.bf16.mxu0 0
        %716 = vmatpush1.bf16.xpose.msra.mxu0 0
        %717 = vmatprep.subr.bf16.mxu0 0
        %718 = vmatpush1.bf16.xpose.msra.mxu0 0
        %719 = vmatprep.subr.bf16.mxu0 0
        %720 = vmatpush1.bf16.xpose.msra.mxu0 0
        %721 = vmatprep.subr.bf16.mxu0 0
        %722 = vmatpush1.bf16.xpose.msra.mxu0 0
        %723 = vmatprep.subr.bf16.mxu0 0
        %724 = vmatpush1.bf16.xpose.msra.mxu0 0
        %725 = vmatprep.subr.bf16.mxu0 0
        %726 = vmatpush1.bf16.xpose.msra.mxu0 0
        %727 = vmatprep.subr.bf16.mxu0 0
        %728 = vmatpush1.bf16.xpose.msra.mxu0 0
        %729 = vmatprep.mubr.bf16.mxu0 0
        %730 = vmatmul.mubr.bf16.gmra.mrb[0].mxu0 %v692
        %v731 = vpop.f32.mrb[0].mxu0
        %v732 = vadd.f32 0.0, %v731
        %v733 = vpop.f32.mrb[0].mxu0
        %v734 = vpop.f32.mrb[0].mxu0
        %v735 = vpop.f32.mrb[0].mxu0
        %736 = vdwg.mxu0
        %v737 = vsel %vm359, %v732, -inf
        %738 = vmax.xlane.f32.xlu0 %v737
        %v739 = vpop.xlane.xlu0 %738
        %v740 = vsub.f32 %v732, %v739
        %v741 = vmul.f32 %v740, 1.442695
        %v742 = vpow.pop %v741
        %v743 = vsel %vm359, %v742, 0.0
        %744 = vadd.xlane.f32.xlu0 %v743
        %v745 = vpop.xlane.xlu0 %744
        %v746 = vrcp.pop %v745
        %v747 = vmul.f32 %v742, %v746
        %v748 = vpack.c.bf16 %v747, %v747
        %749 = vrot.lane.b32.xlu0 %v355, 40
        %v750 = vpop.permute.xlu0 %749
        %v752 = vsel %vm359, %v748, 0
        %v755 = vsel %vm423, %v750, 0
        %757 = vmatprep.subr.bf16.mxu0 0
        %758 = vmatpush1.bf16.msra.mxu0 %v755
        %759 = vmatprep.subr.bf16.mxu0 0
        %760 = vmatpush1.bf16.msra.mxu0 0
        %761 = vmatprep.subr.bf16.mxu0 0
        %762 = vmatpush1.bf16.msra.mxu0 0
        %763 = vmatprep.subr.bf16.mxu0 0
        %764 = vmatpush1.bf16.msra.mxu0 0
        %765 = vmatprep.subr.bf16.mxu0 0
        %766 = vmatpush1.bf16.msra.mxu0 0
        %767 = vmatprep.subr.bf16.mxu0 0
        %768 = vmatpush1.bf16.msra.mxu0 0
        %769 = vmatprep.subr.bf16.mxu0 0
        %770 = vmatpush1.bf16.msra.mxu0 0
        %771 = vmatprep.subr.bf16.mxu0 0
        %772 = vmatpush1.bf16.msra.mxu0 0
        %773 = vmatprep.subr.bf16.mxu0 0
        %774 = vmatpush1.bf16.msra.mxu0 0
        %775 = vmatprep.subr.bf16.mxu0 0
        %776 = vmatpush1.bf16.msra.mxu0 0
        %777 = vmatprep.subr.bf16.mxu0 0
        %778 = vmatpush1.bf16.msra.mxu0 0
        %779 = vmatprep.subr.bf16.mxu0 0
        %780 = vmatpush1.bf16.msra.mxu0 0
        %781 = vmatprep.subr.bf16.mxu0 0
        %782 = vmatpush1.bf16.msra.mxu0 0
        %783 = vmatprep.subr.bf16.mxu0 0
        %784 = vmatpush1.bf16.msra.mxu0 0
        %785 = vmatprep.subr.bf16.mxu0 0
        %786 = vmatpush1.bf16.msra.mxu0 0
        %787 = vmatprep.subr.bf16.mxu0 0
        %788 = vmatpush1.bf16.msra.mxu0 0
        %789 = vmatprep.mubr.bf16.mxu0 0
        %790 = vmatmul.mubr.bf16.gmra.mrb[0].mxu0 %v752
        %v791 = vpop.f32.mrb[0].mxu0
        %v792 = vadd.f32 0.0, %v791
        %v793 = vpop.f32.mrb[0].mxu0
        %v794 = vpop.f32.mrb[0].mxu0
        %v795 = vpop.f32.mrb[0].mxu0
        %796 = vdwg.mxu0
        %798 = vrot.lane.b32.xlu0 %v572, 8
        %v799 = vpop.permute.xlu0 %798
        %802 = vrot.lane.b32.xlu0 %v682, 16
        %v803 = vpop.permute.xlu0 %802
        %806 = vrot.lane.b32.xlu0 %v792, 24
        %v807 = vpop.permute.xlu0 %806
        %v809 = vsel %vm359, %v462, %v799
        %vm810 = vcmask 130048
        %v811 = vsel %vm810, %v809, %v803
        %vm812 = vcmask 195584
        %v813 = vsel %vm812, %v811, %v807
        %814 = vst.msk [vmem:[%s241] sm:$0xff] %vm293, %v813
        %s815 = sand.u32 %s121, 1
        %s816 = scalar_lea.sflag [#allocation4], %s815
        %s817 = sand.u32 %s121, 1
        %s818 = smul.addr %s817, 8
        %s819 = scalar_lea.vmem [#allocation8], %s818
        // Predicated region
        $region45: #{multi_head_attention.1} parent=31 // pred_check
          %p820 = pneg %p131
        $region46: #{multi_head_attention.1} parent=31 // pred_check_branch
          %822 = sbr.rel (%p820) target = $region48
        $region47: #{multi_head_attention.1} parent=31 // pred_region
          %s824 = ssub.s32 128, 128
          %825 = vsyncadd %s816, %s824
          %s826 = sadd.s32 %s26, %s25
          %s827 = smul.addr %s826, 128
          %s828 = scalar_lea.hbm %s3, %s827
          %s830 = sshll.u32 %s819, 4
          %s831 = int_to_ptr.vmem [resolvable:$true] %s830
          %833 = dma.vmem_to_hbm [thread:$0]  %s831, 128, %s828, %s816
        $region48: #{multi_head_attention.1} parent=31 // pred_fallthru
          _
      $region32: #{multi_head_attention.1} parent=5 // pred_fallthru
        _
      %p834 = scmp.le.s32.totalorder 2, %s16
      // Predicated region
      $region49: #{multi_head_attention.1} parent=5 // pred_check
        %p835 = pneg %p834
      $region50: #{multi_head_attention.1} parent=5 // pred_check_branch
        %837 = sbr.rel (%p835) target = $region52
      $region51: #{multi_head_attention.1} parent=5 // pred_region
        %s838 = ssub.s32 %s16, 2
        // Predicated region
        $region53: #{multi_head_attention.1} parent=51 // pred_check
          %p839 = pneg %p137
        $region54: #{multi_head_attention.1} parent=51 // pred_check_branch
          %841 = sbr.rel (%p839) target = $region56
        $region55: #{multi_head_attention.1} parent=51 // pred_region
          %s842 = sand.u32 %s122, 1
          %s843 = scalar_lea.sflag [#allocation4], %s842
          %s844 = sand.u32 %s122, 1
          %s845 = smul.addr %s844, 8
          %s846 = scalar_lea.vmem [#allocation8], %s845
          %847 = dma.done %s843, 128
        $region56: #{multi_head_attention.1} parent=51 // pred_fallthru
          _
      $region52: #{multi_head_attention.1} parent=5 // pred_fallthru
        _
    $region6: #{multi_head_attention.1} parent=1 // loop_footer
      %s20 = sadd.s32 1, %s16
    $region7: #{multi_head_attention.1} parent=1 // loop_footer_branch
      %15 = sbr.rel target = $region3
    $region8: #{multi_head_attention.1} parent=1 // loop_exit
      _
    %848 = vsyncpa [#allocation3], 1
    %s849 = scalar_lea.sflag [#allocation3], 1
    %850 = vsyncpa %s849, 1
    %851 = vsyncpa [#allocation6], 1
    %852 = vsyncpa [#allocation4], 1
    %s853 = scalar_lea.sflag [#allocation4], 1
    %854 = vsyncpa %s853, 1

</llo_original>
